<compile_context>
chip_gen: v6e
topology: v6e:2x2x1
jax: 0.10.0
libtpu: 0.0.40
codegen_flags: <defaults>
</compile_context>

<pallas_src>
import jax
import jax.numpy as jnp
import numpy as np
from jax.experimental import pallas as pl
from jax.experimental.pallas import tpu as pltpu

_SUBLANE = 8


def _round_up(n: int, m: int) -> int:
    return ((n + m - 1) // m) * m


def _x_tile_budget_bytes() -> int:
    # Budget for the (double-buffered, f32) streamed x tile.  12 MiB fits v5e's 16 MiB
    # default scoped VMEM with headroom; cap at 1/8 of physical capacity so the smaller
    # v7x (64 MiB physical) is never over-committed.
    try:
        phys = pltpu.get_tpu_info().vmem_capacity_bytes
    except Exception:  # interpret mode / API drift — fall back to conservative cap
        phys = 64 << 20
    return min(12 << 20, phys // 8)


def _pick_tb(B: int, D: int, tb: int) -> int:
    # Cap tb so 2 (double buffer) * tb * D * 4 bytes (f32) fits the VMEM budget.
    cap = max(_SUBLANE, (_x_tile_budget_bytes() // (2 * D * 4)) // _SUBLANE * _SUBLANE)
    tb = min(tb, cap)
    # Prefer >= 2 batch tiles when B is large enough so the "parallel" grid axis can be
    # split across v7x's two TensorCores (no-op on single-TC v5e/v6e).
    if B >= 2 * _SUBLANE:
        tb = min(tb, _round_up(-(-B // 2), _SUBLANE))
    if tb >= B:
        return B                       # single full-batch tile (block dim == array dim)
    return max(_SUBLANE, (tb // _SUBLANE) * _SUBLANE)


def prediction_task_kernel(x_ref, w1_ref, b1_ref, w2_ref, b2_ref, o_ref):
    # task_block: Linear(D, H) + ReLU.  x arrives as f32 (single HBM read) and is cast
    # to bf16 here (cheap VPU cast) for the MXU; accumulation is f32.
    # TODO(synk): for strict f32 parity with torch.nn.Linear drop this cast and let the
    # MXU run the f32 (bf16x3) decomposition instead.
    x = x_ref[...].astype(jnp.bfloat16)
    h = jnp.dot(x, w1_ref[...], preferred_element_type=jnp.float32)
    h = jnp.maximum(h + b1_ref[...], 0.0)                                   # (tb, H) f32

    # pre: Linear(H, 1) + Sigmoid.  The N=1 matmul is a VPU multiply + XLU lane reduce
    # (keeps the MXU free); b2 is a scalar read from SMEM; sigmoid runs on the EUP.
    logits = jnp.sum(h * w2_ref[...], axis=-1, keepdims=True) + b2_ref[0]   # (tb, 1)
    o_ref[...] = jax.nn.sigmoid(logits).astype(o_ref.dtype)


def prediction_task_forward(x, w1, b1, w2, b2, *, tb=2048):
    """Fused PredictionTask forward: sigmoid(relu(x @ w1 + b1) @ w2 + b2).

    x: (B, D) f32;  w1: (D, H);  b1: (H,) or (1, H);  w2: (H, 1) or (H,);  b2: scalar-ish.
    Returns (B, 1) f32 probabilities.
    """
    B, D = x.shape
    H = w1.shape[1] if w1.ndim == 2 else w1.shape[0]
    tb = _pick_tb(B, D, tb)
    num_tiles = pl.cdiv(B, tb)

    # Small VMEM-resident operands (a few KiB) — prepared once, outside the hot path.
    w1b = jnp.reshape(w1, (D, H)).astype(jnp.bfloat16)
    b1r = jnp.reshape(b1, (1, H)).astype(jnp.float32)
    w2r = jnp.reshape(w2, (1, H)).astype(jnp.float32)
    b2s = jnp.reshape(b2, (-1,))[:1].astype(jnp.float32)    # (1,) scalar for SMEM

    resident = dict(pipeline_mode=pl.Buffered(1))  # constant index_map -> single buffer

    return pl.pallas_call(
        prediction_task_kernel,
        out_shape=jax.ShapeDtypeStruct((B, 1), jnp.float32),
        grid=(num_tiles,),
        in_specs=[
            # x: streamed, double-buffered; last dim == full D (Mosaic pads lanes);
            # ragged last batch tile handled by Pallas (OOB writes are dropped).
            pl.BlockSpec((tb, D), lambda i: (i, 0)),
            pl.BlockSpec((D, H), lambda i: (0, 0), **resident),   # w1: VMEM-resident
            pl.BlockSpec((1, H), lambda i: (0, 0), **resident),   # b1: VMEM-resident
            pl.BlockSpec((1, H), lambda i: (0, 0), **resident),   # w2 (as row): resident
            pl.BlockSpec(memory_space=pltpu.SMEM),                # b2: scalar in SMEM
        ],
        out_specs=pl.BlockSpec((tb, 1), lambda i: (i, 0)),
        compiler_params=pltpu.CompilerParams(
            dimension_semantics=("parallel",),   # independent batch tiles (megacore)
        ),
        # TODO(synk): for very large D (>= ~2-4K) add a trailing "arbitrary" K grid axis
        # with an f32 accumulator scratch instead of one (tb, D) x block per step.
    )(x.astype(jnp.float32), w1b, b1r, w2r, b2s)


def _torch_linear_init(key, fan_in, fan_out):
    """Deterministic init mimicking torch.nn.Linear (uniform +/- 1/sqrt(fan_in))."""
    kw, kb = jax.random.split(key)
    bound = 1.0 / np.sqrt(fan_in)
    w = jax.random.uniform(kw, (fan_in, fan_out), jnp.float32, -bound, bound)
    b = jax.random.uniform(kb, (1, fan_out), jnp.float32, -bound, bound)
    return w, b


if __name__ == "__main__":
    # Small shapes consistent with the module (body output D, task_block hidden H,
    # binary-classification pre -> 1 logit).  Non-128-aligned D/H and a batch that is
    # not a multiple of the tile exercise Mosaic lane padding + the ragged last tile.
    B, D, H = 200, 96, 40

    key = jax.random.PRNGKey(0)
    kx, k1, k2 = jax.random.split(key, 3)
    x = jax.random.normal(kx, (B, D), jnp.float32)
    w1, b1 = _torch_linear_init(k1, D, H)   # task_block Linear(D, H)
    w2, b2 = _torch_linear_init(k2, H, 1)   # pre Linear(H, 1)

    out = prediction_task_forward(x, w1, b1, w2, b2)
    out = jax.block_until_ready(out)
    assert out.shape == (B, 1)

    # Pure-JAX reference with the same bf16 cast on the first matmul and the same
    # multiply+reduce formulation of the H->1 projection.
    h = jnp.maximum(
        jnp.dot(x.astype(jnp.bfloat16), w1.astype(jnp.bfloat16),
                preferred_element_type=jnp.float32) + b1, 0.0)
    ref = jax.nn.sigmoid(
        jnp.sum(h * jnp.reshape(w2, (1, -1)), axis=-1, keepdims=True)
        + jnp.reshape(b2, (1, 1)))
    np.testing.assert_allclose(np.asarray(out), np.asarray(ref), atol=1e-4, rtol=1e-4)

    # TODO(synk): compute_loss / calculate_metrics / fit / evaluate are training-time
    # utilities of the module, not part of forward(); not implemented as kernels.
    print("KERNEL_OK")
</pallas_src>

<mosaic_0001>
module attributes {stable_mosaic.version = 11 : i64} {
  func.func @prediction_task_kernel(%arg0: i32, %arg1: memref<104x96xf32, #tpu.memory_space<vmem>>, %arg2: memref<96x40xbf16, #tpu.memory_space<vmem>>, %arg3: memref<1x40xf32, #tpu.memory_space<vmem>>, %arg4: memref<1x40xf32, #tpu.memory_space<vmem>>, %arg5: memref<1xf32, #tpu.memory_space<smem>>, %arg6: memref<104x1xf32, #tpu.memory_space<vmem>>) attributes {dimension_semantics = [#tpu.dimension_semantics<parallel>], iteration_bounds = array<i64: 2>, scalar_prefetch = 0 : i64, scratch_operands = 0 : i64, tpu.core_type = #tpu.core_type<tc>, window_params = [{transform_indices = @transform_0, window_bounds = array<i64: 104, 96>}, {pipeline_mode = #tpu.pipeline_mode<synchronous>, transform_indices = @transform_1, window_bounds = array<i64: 96, 40>}, {pipeline_mode = #tpu.pipeline_mode<synchronous>, transform_indices = @transform_2, window_bounds = array<i64: 1, 40>}, {pipeline_mode = #tpu.pipeline_mode<synchronous>, transform_indices = @transform_3, window_bounds = array<i64: 1, 40>}, {transform_indices = @transform_4, window_bounds = array<i64: 1>}, {transform_indices = @transform_5, window_bounds = array<i64: 104, 1>}]} {
    %c0 = arith.constant 0 : index
    %c0_0 = arith.constant 0 : index
    %0 = vector.load %arg1[%c0, %c0_0] : memref<104x96xf32, #tpu.memory_space<vmem>>, vector<104x96xf32>
    %1 = arith.truncf %0 : vector<104x96xf32> to vector<104x96xbf16>
    %c0_1 = arith.constant 0 : index
    %c0_2 = arith.constant 0 : index
    %2 = vector.load %arg2[%c0_1, %c0_2] : memref<96x40xbf16, #tpu.memory_space<vmem>>, vector<96x40xbf16>
    %cst = arith.constant dense<0.000000e+00> : vector<104x40xf32>
    %3 = tpu.matmul %1, %2, %cst {dimension_numbers = #tpu.dot_dimension_numbers<[1], [0], [0], [1], [0, 0, 1, 1], [], []>} : vector<104x96xbf16>, vector<96x40xbf16>, vector<104x40xf32> -> vector<104x40xf32>
    %c0_3 = arith.constant 0 : index
    %c0_4 = arith.constant 0 : index
    %4 = vector.load %arg3[%c0_3, %c0_4] : memref<1x40xf32, #tpu.memory_space<vmem>>, vector<1x40xf32>
    %5 = vector.broadcast %4 : vector<1x40xf32> to vector<104x40xf32>
    %6 = arith.addf %3, %5 : vector<104x40xf32>
    %cst_5 = arith.constant 0.000000e+00 : f32
    %7 = vector.broadcast %cst_5 : f32 to vector<104x40xf32>
    %8 = arith.maximumf %6, %7 : vector<104x40xf32>
    %c0_6 = arith.constant 0 : index
    %c0_7 = arith.constant 0 : index
    %9 = vector.load %arg4[%c0_6, %c0_7] : memref<1x40xf32, #tpu.memory_space<vmem>>, vector<1x40xf32>
    %10 = vector.broadcast %9 : vector<1x40xf32> to vector<104x40xf32>
    %11 = arith.mulf %8, %10 : vector<104x40xf32>
    %cst_8 = arith.constant dense<0.000000e+00> : vector<104xf32>
    %12 = vector.multi_reduction <add>, %11, %cst_8 [1] : vector<104x40xf32> to vector<104xf32>
    %13 = vector.shape_cast %12 : vector<104xf32> to vector<104x1xf32>
    %c0_9 = arith.constant 0 : index
    %14 = memref.load %arg5[%c0_9] : memref<1xf32, #tpu.memory_space<smem>>
    %15 = vector.broadcast %14 : f32 to vector<104x1xf32>
    %16 = arith.addf %13, %15 : vector<104x1xf32>
    %17 = arith.negf %16 : vector<104x1xf32>
    %18 = math.exp %17 : vector<104x1xf32>
    %cst_10 = arith.constant 1.000000e+00 : f32
    %19 = vector.broadcast %cst_10 : f32 to vector<104x1xf32>
    %20 = arith.addf %19, %18 : vector<104x1xf32>
    %21 = arith.divf %19, %20 : vector<104x1xf32>
    %c0_11 = arith.constant 0 : index
    %c0_12 = arith.constant 0 : index
    %22 = vector.load %arg6[%c0_11, %c0_12] : memref<104x1xf32, #tpu.memory_space<vmem>>, vector<104x1xf32>
    tpu.vector_store %arg6[%c0_11, %c0_12], %21 {strides = array<i32>} : memref<104x1xf32, #tpu.memory_space<vmem>>, vector<104x1xf32>,
    return
  }
  func.func @transform_0(%arg0: i32) -> (i32, i32) {
    %c0_i32 = arith.constant 0 : i32
    %c0_i32_0 = arith.constant 0 : i32
    return %arg0, %c0_i32 : i32, i32
  }
  func.func @transform_1(%arg0: i32) -> (i32, i32) {
    %c0_i32 = arith.constant 0 : i32
    %c0_i32_0 = arith.constant 0 : i32
    %c0_i32_1 = arith.constant 0 : i32
    return %c0_i32, %c0_i32_0 : i32, i32
  }
  func.func @transform_2(%arg0: i32) -> (i32, i32) {
    %c0_i32 = arith.constant 0 : i32
    %c0_i32_0 = arith.constant 0 : i32
    %c0_i32_1 = arith.constant 0 : i32
    return %c0_i32, %c0_i32_0 : i32, i32
  }
  func.func @transform_3(%arg0: i32) -> (i32, i32) {
    %c0_i32 = arith.constant 0 : i32
    %c0_i32_0 = arith.constant 0 : i32
    %c0_i32_1 = arith.constant 0 : i32
    return %c0_i32, %c0_i32_0 : i32, i32
  }
  func.func @transform_4(%arg0: i32) -> i32 {
    %c0_i32 = arith.constant 0 : i32
    %c0_i32_0 = arith.constant 0 : i32
    return %c0_i32 : i32
  }
  func.func @transform_5(%arg0: i32) -> (i32, i32) {
    %c0_i32 = arith.constant 0 : i32
    %c0_i32_0 = arith.constant 0 : i32
    return %arg0, %c0_i32 : i32, i32
  }
}

</mosaic_0001>

<llo_original>
// kernel: tpu_custom_call.1
$region0: #{tpu_custom_call.1}
  #allocation0 [shape = 'u32[]', space=smem, size = 0x4, offset = 0x4, fixed_abs, tag = 'smem constant byte address 0x4 - core index']
  #allocation1 [shape = 'u32[144,128]{1,0:T(1,128)}', space=vmem, size = 0x12000, scoped, tag = 'internal scratch']
  #allocation2 [shape = 'f32[1]{0:T(128)S(6)}', space=smem, size = 0x200, scoped, tag = 'scoped memory for tpu_custom_call.1']
  %s0 = inlined_call_operand.vmem [shape: f32[200,96], index: 0, kind: input, shape index: {}]
  %s1 = inlined_call_operand.vmem [shape: bf16[96,40], index: 1, kind: input, shape index: {}]
  %s2 = inlined_call_operand.vmem [shape: f32[1,40], index: 2, kind: input, shape index: {}]
  %s3 = inlined_call_operand.vmem [shape: f32[1,40], index: 3, kind: input, shape index: {}]
  %s4 = inlined_call_operand.<no memory space> [shape: f32[1], index: 4, kind: input, shape index: {}]
  %s5 = inlined_call_operand.vmem [shape: f32[200,1], index: 5, kind: output, shape index: {}]
  %s6 = sld [smem:[#allocation0]]
  $region101: #{tpu_custom_call.1} parent=0
    _
  %s8 = ssub.s32 1, %s6
  %s9 = scalar_select 0, %s8, %s6
  %10 = sst [smem:[#allocation2]] %s4
  $region1: #{tpu_custom_call.1} parent=0
    #allocation3 [shape = 'u8[106496]{0}', space=vmem, size = 0x1a000, scoped, tag = 'output window, operand 0']
    loop: start=0, step=1, limit=4
    $region2: #{tpu_custom_call.1} parent=1 // loop_pre_header
      _
    $region3: #{tpu_custom_call.1} parent=1 // loop_header
      %s12 = sphi 0, %s16
      %p13 = scmp.ge.s32.totalorder %s12, 4
      %s22 = sphi 0, %s24
      %s25 = sphi 0, %s22
      %s26 = sphi 0, %s25
      %s42 = sphi 0, %s26
      %s46 = sphi 0, %s46
      %s48 = sphi 0, %s46
      %s49 = sphi 0, %s48
      %s63 = sphi 0, %s49
      %s67 = sphi 0, %s67
      %s69 = sphi 0, %s67
      %s70 = sphi 0, %s69
      %s84 = sphi 0, %s70
      %s88 = sphi 0, %s88
      %s90 = sphi 0, %s88
      %s91 = sphi 0, %s90
      %s105 = sphi 0, %s91
      %s109 = sphi 0, %s109
      %s111 = sphi 0, %s109
      %s112 = sphi 0, %s111
      %s126 = sphi 0, %s112
      %s132 = sphi 0, %s134
      %s135 = sphi 0, %s132
      %s136 = sphi 0, %s135
      %s152 = sphi 0, %s136
    $region4: #{tpu_custom_call.1} parent=1 // loop_header_branch
      %15 = sbr.rel (%p13) target = $region8
    $region5: #{tpu_custom_call.1} parent=1 // loop_body
      %s17 = ssub.s32 %s12, 1
      %s18 = ssub.s32 %s12, 2
      %s19 = sadd.s32 %s12, 1
      %s20 = ssub.s32 %s12, %s19
      %p21 = scmp.eq.s32.totalorder %s20, 0
      %s23 = sadd.s32 %s22, 1
      %s24 = scalar_select %p21, %s22, %s23
      %p27 = pneg %p21
      %p28 = scmp.eq.s32.totalorder %s12, 1
      %p29 = por %p27, %p28
      %p30 = scmp.ne.s32.totalorder %s22, %s25
      %p31 = scmp.eq.s32.totalorder %s12, 0
      %p32 = por %p30, %p31
      %p33 = scmp.ne.s32.totalorder %s22, %s25
      %p34 = scmp.eq.s32.totalorder %s17, 1
      %p35 = por %p33, %p34
      %p36 = scmp.ne.s32.totalorder %s25, %s26
      %p37 = scmp.eq.s32.totalorder %s17, 0
      %p38 = por %p36, %p37
      %p39 = scmp.ne.s32.totalorder %s25, %s26
      %p40 = scmp.eq.s32.totalorder %s18, 1
      %p41 = por %p39, %p40
      %p43 = scmp.ne.s32.totalorder %s26, %s42
      %p44 = scmp.eq.s32.totalorder %s18, 0
      %p45 = por %p43, %p44
      %s47 = sadd.s32 %s46, 1
      %p50 = scmp.eq.s32.totalorder %s12, 1
      %p51 = scmp.ne.s32.totalorder %s46, %s48
      %p52 = scmp.eq.s32.totalorder %s12, 0
      %p53 = por %p51, %p52
      %p54 = scmp.ne.s32.totalorder %s46, %s48
      %p55 = scmp.eq.s32.totalorder %s17, 1
      %p56 = por %p54, %p55
      %p57 = scmp.ne.s32.totalorder %s48, %s49
      %p58 = scmp.eq.s32.totalorder %s17, 0
      %p59 = por %p57, %p58
      %p60 = scmp.ne.s32.totalorder %s48, %s49
      %p61 = scmp.eq.s32.totalorder %s18, 1
      %p62 = por %p60, %p61
      %p64 = scmp.ne.s32.totalorder %s49, %s63
      %p65 = scmp.eq.s32.totalorder %s18, 0
      %p66 = por %p64, %p65
      %s68 = sadd.s32 %s67, 1
      %p71 = scmp.eq.s32.totalorder %s12, 1
      %p72 = scmp.ne.s32.totalorder %s67, %s69
      %p73 = scmp.eq.s32.totalorder %s12, 0
      %p74 = por %p72, %p73
      %p75 = scmp.ne.s32.totalorder %s67, %s69
      %p76 = scmp.eq.s32.totalorder %s17, 1
      %p77 = por %p75, %p76
      %p78 = scmp.ne.s32.totalorder %s69, %s70
      %p79 = scmp.eq.s32.totalorder %s17, 0
      %p80 = por %p78, %p79
      %p81 = scmp.ne.s32.totalorder %s69, %s70
      %p82 = scmp.eq.s32.totalorder %s18, 1
      %p83 = por %p81, %p82
      %p85 = scmp.ne.s32.totalorder %s70, %s84
      %p86 = scmp.eq.s32.totalorder %s18, 0
      %p87 = por %p85, %p86
      %s89 = sadd.s32 %s88, 1
      %p92 = scmp.eq.s32.totalorder %s12, 1
      %p93 = scmp.ne.s32.totalorder %s88, %s90
      %p94 = scmp.eq.s32.totalorder %s12, 0
      %p95 = por %p93, %p94
      %p96 = scmp.ne.s32.totalorder %s88, %s90
      %p97 = scmp.eq.s32.totalorder %s17, 1
      %p98 = por %p96, %p97
      %p99 = scmp.ne.s32.totalorder %s90, %s91
      %p100 = scmp.eq.s32.totalorder %s17, 0
      %p101 = por %p99, %p100
      %p102 = scmp.ne.s32.totalorder %s90, %s91
      %p103 = scmp.eq.s32.totalorder %s18, 1
      %p104 = por %p102, %p103
      %p106 = scmp.ne.s32.totalorder %s91, %s105
      %p107 = scmp.eq.s32.totalorder %s18, 0
      %p108 = por %p106, %p107
      %s110 = sadd.s32 %s109, 1
      %p113 = scmp.eq.s32.totalorder %s12, 1
      %p114 = scmp.ne.s32.totalorder %s109, %s111
      %p115 = scmp.eq.s32.totalorder %s12, 0
      %p116 = por %p114, %p115
      %p117 = scmp.ne.s32.totalorder %s109, %s111
      %p118 = scmp.eq.s32.totalorder %s17, 1
      %p119 = por %p117, %p118
      %p120 = scmp.ne.s32.totalorder %s111, %s112
      %p121 = scmp.eq.s32.totalorder %s17, 0
      %p122 = por %p120, %p121
      %p123 = scmp.ne.s32.totalorder %s111, %s112
      %p124 = scmp.eq.s32.totalorder %s18, 1
      %p125 = por %p123, %p124
      %p127 = scmp.ne.s32.totalorder %s112, %s126
      %p128 = scmp.eq.s32.totalorder %s18, 0
      %p129 = por %p127, %p128
      %s130 = ssub.s32 %s12, %s19
      %p131 = scmp.eq.s32.totalorder %s130, 0
      %s133 = sadd.s32 %s132, 1
      %s134 = scalar_select %p131, %s132, %s133
      %p137 = pneg %p131
      %p138 = scmp.eq.s32.totalorder %s12, 1
      %p139 = por %p137, %p138
      %p140 = scmp.ne.s32.totalorder %s132, %s135
      %p141 = scmp.eq.s32.totalorder %s12, 0
      %p142 = por %p140, %p141
      %p143 = scmp.ne.s32.totalorder %s132, %s135
      %p144 = scmp.eq.s32.totalorder %s17, 1
      %p145 = por %p143, %p144
      %p146 = scmp.ne.s32.totalorder %s135, %s136
      %p147 = scmp.eq.s32.totalorder %s17, 0
      %p148 = por %p146, %p147
      %p149 = scmp.ne.s32.totalorder %s135, %s136
      %p150 = scmp.eq.s32.totalorder %s18, 1
      %p151 = por %p149, %p150
      %p153 = scmp.ne.s32.totalorder %s136, %s152
      %p154 = scmp.eq.s32.totalorder %s18, 0
      %p155 = por %p153, %p154
      %p156 = scmp.le.s32.totalorder 1, %s12
      %p157 = scmp.lt.s32.totalorder %s12, 3
      %p158 = pnand %p156, %p157
      %p159 = pneg %p158
      // Predicated region
      $region9: #{tpu_custom_call.1} parent=5 // pred_check
        _
      $region10: #{tpu_custom_call.1} parent=5 // pred_check_branch
        %161 = sbr.rel (%p158) target = $region12
      $region11: #{tpu_custom_call.1} parent=5 // pred_region
        %s162 = ssub.s32 %s12, 1
        // Predicated region
        $region13: #{tpu_custom_call.1} parent=11 // pred_check
          %p163 = pneg %p59
        $region14: #{tpu_custom_call.1} parent=11 // pred_check_branch
          %165 = sbr.rel (%p163) target = $region16
        $region15: #{tpu_custom_call.1} parent=11 // pred_region
          _
        $region16: #{tpu_custom_call.1} parent=11 // pred_fallthru
          _
        // Predicated region
        $region17: #{tpu_custom_call.1} parent=11 // pred_check
          %p166 = pneg %p80
        $region18: #{tpu_custom_call.1} parent=11 // pred_check_branch
          %168 = sbr.rel (%p166) target = $region20
        $region19: #{tpu_custom_call.1} parent=11 // pred_region
          _
        $region20: #{tpu_custom_call.1} parent=11 // pred_fallthru
          _
        // Predicated region
        $region21: #{tpu_custom_call.1} parent=11 // pred_check
          %p169 = pneg %p101
        $region22: #{tpu_custom_call.1} parent=11 // pred_check_branch
          %171 = sbr.rel (%p169) target = $region24
        $region23: #{tpu_custom_call.1} parent=11 // pred_region
          _
        $region24: #{tpu_custom_call.1} parent=11 // pred_fallthru
          _
        // Predicated region
        $region25: #{tpu_custom_call.1} parent=11 // pred_check
          %p172 = pneg %p122
        $region26: #{tpu_custom_call.1} parent=11 // pred_check_branch
          %174 = sbr.rel (%p172) target = $region28
        $region27: #{tpu_custom_call.1} parent=11 // pred_region
          _
        $region28: #{tpu_custom_call.1} parent=11 // pred_fallthru
          _
      $region12: #{tpu_custom_call.1} parent=5 // pred_fallthru
        _
      %p175 = scmp.lt.s32.totalorder %s12, 2
      // Predicated region
      $region29: #{tpu_custom_call.1} parent=5 // pred_check
        %p176 = pneg %p175
      $region30: #{tpu_custom_call.1} parent=5 // pred_check_branch
        %178 = sbr.rel (%p176) target = $region32
      $region31: #{tpu_custom_call.1} parent=5 // pred_region
        // Predicated region
        $region33: #{tpu_custom_call.1} parent=31 // pred_check
          %p179 = pneg %p32
        $region34: #{tpu_custom_call.1} parent=31 // pred_check_branch
          %181 = sbr.rel (%p179) target = $region36
        $region35: #{tpu_custom_call.1} parent=31 // pred_region
          %s182 = smul.u32 13, %s12
          %s183 = ssub.s32 25, %s182
          %p184 = scmp.lt.s32.totalorder %s183, 13
          %s185 = scalar_select %p184, %s183, 13
          %s186 = smul.u32 128, %s185
          %p187 = scmp.lt.s32.totalorder %s182, 24
          %s188 = scalar_select %p187, %s182, 24
          %s189 = smul.addr %s188, 8
          %s190 = scalar_lea.vmem %s0, %s189
          %s191 = smul.u32 13, %s12
          %s192 = ssub.s32 25, %s191
          %p193 = scmp.lt.s32.totalorder %s192, 13
          %s194 = scalar_select %p193, %s192, 13
          %s195 = smul.u32 128, %s194
        $region36: #{tpu_custom_call.1} parent=31 // pred_fallthru
          _
      $region32: #{tpu_custom_call.1} parent=5 // pred_fallthru
        _
      %p196 = scmp.le.s32.totalorder 1, %s12
      %p197 = scmp.lt.s32.totalorder %s12, 3
      %p198 = pnand %p196, %p197
      %p199 = pneg %p198
      // Predicated region
      $region37: #{tpu_custom_call.1} parent=5 // pred_check
        _
      $region38: #{tpu_custom_call.1} parent=5 // pred_check_branch
        %201 = sbr.rel (%p198) target = $region40
      $region39: #{tpu_custom_call.1} parent=5 // pred_region
        %s202 = ssub.s32 %s12, 1
        %s203 = smul.u32 13, %s17
        %s204 = ssub.s32 25, %s203
        %p205 = scmp.lt.s32.totalorder %s204, 13
        %s206 = scalar_select %p205, %s204, 13
        %s207 = smul.u32 128, %s206
        %p208 = scmp.lt.s32.totalorder %s203, 24
        %s209 = scalar_select %p208, %s203, 24
        %s210 = smul.addr %s209, 8
        %s211 = scalar_lea.vmem %s0, %s210
        %p212 = pneg %p38
        %p213 = pneg %p35
        %p214 = pneg %p59
        %p215 = pneg %p56
        %p216 = pneg %p80
        %p217 = pneg %p77
        %p218 = pneg %p101
        %p219 = pneg %p98
        %p220 = pneg %p122
        %p221 = pneg %p119
        %p222 = pneg %p148
        %p223 = pneg %p145
        %s224 = sand.u32 %s135, 1
        %s225 = sand.u32 %s135, 1
        %s226 = smul.addr %s225, 104
        %s227 = scalar_lea.vmem [#allocation3], %s226
        %s228 = smul.u32 13, %s17
        %s229 = ssub.s32 25, %s228
        %p230 = scmp.lt.s32.totalorder %s229, 13
        %s231 = scalar_select %p230, %s229, 13
        %s232 = smul.u32 128, %s231
        %p233 = scmp.lt.s32.totalorder %s228, 24
        %s234 = scalar_select %p233, %s228, 24
        %s235 = smul.addr %s234, 8
        %s236 = scalar_lea.vmem %s0, %s235
        %s237 = smul.u32 13, %s17
        %s238 = ssub.s32 25, %s237
        %p239 = scmp.lt.s32.totalorder %s238, 13
        %s240 = scalar_select %p239, %s238, 13
        %s241 = smul.u32 128, %s240
        %s242 = smul.u32 13, %s17
        %s243 = ssub.s32 25, %s242
        %p244 = scmp.lt.s32.totalorder %s243, 13
        %s245 = scalar_select %p244, %s243, 13
        %s246 = smul.u32 128, %s245
        %v248 = vld [vmem:[%s236] sm:$0xff]
        %v249 = vld [vmem:[%s236 + $0x8] sm:$0xff]
        %v250 = vld [vmem:[%s236 + $0x10] sm:$0xff]
        %v251 = vld [vmem:[%s236 + $0x18] sm:$0xff]
        %v252 = vld [vmem:[%s236 + $0x20] sm:$0xff]
        %v253 = vld [vmem:[%s236 + $0x28] sm:$0xff]
        %v254 = vld [vmem:[%s236 + $0x30] sm:$0xff]
        %v255 = vld [vmem:[%s236 + $0x38] sm:$0xff]
        %v256 = vld [vmem:[%s236 + $0x40] sm:$0xff]
        %v257 = vld [vmem:[%s236 + $0x48] sm:$0xff]
        %v258 = vld [vmem:[%s236 + $0x50] sm:$0xff]
        %v259 = vld [vmem:[%s236 + $0x58] sm:$0xff]
        %v260 = vld [vmem:[%s236 + $0x60] sm:$0xff]
        %v261 = vpack.c.bf16 %v249, %v248
        %v262 = vpack.c.bf16 %v251, %v250
        %v263 = vpack.c.bf16 %v253, %v252
        %v264 = vpack.c.bf16 %v255, %v254
        %v265 = vpack.c.bf16 %v257, %v256
        %v266 = vpack.c.bf16 %v259, %v258
        %v267 = vpack.c.bf16 %v260, %v260
        %v268 = vld [vmem:[%s1] sm:$0xf]
        %v269 = vld [vmem:[%s1 + $0x4] sm:$0xf]
        %v270 = vld [vmem:[%s1 + $0x8] sm:$0xf]
        %v271 = vld [vmem:[%s1 + $0xc] sm:$0xf]
        %v272 = vld [vmem:[%s1 + $0x10] sm:$0xf]
        %v273 = vld [vmem:[%s1 + $0x14] sm:$0xf]
        %v274 = vld [vmem:[%s1 + $0x18] sm:$0xf]
        %v275 = vld [vmem:[%s1 + $0x1c] sm:$0xf]
        %v276 = vld [vmem:[%s1 + $0x20] sm:$0xf]
        %v277 = vld [vmem:[%s1 + $0x24] sm:$0xf]
        %v278 = vld [vmem:[%s1 + $0x28] sm:$0xf]
        %v279 = vld [vmem:[%s1 + $0x2c] sm:$0xf]
        %v280 = vld [vmem:[%s2] sm:$0x1]
        %v282 = vlaneseq
        %v283 = vshrl.u32 %v282, 7
        %v284 = vsub.s32 0, %v283
        %v285 = vrot.slane %v280, %v284
        %v299 = vunpack.c.l.b16 %v268
        %v300 = vunpack.c.l.b16 %v269
        %v301 = vunpack.c.l.b16 %v270
        %v302 = vunpack.c.l.b16 %v271
        %v303 = vunpack.c.l.b16 %v272
        %v304 = vunpack.c.l.b16 %v273
        %v305 = vunpack.c.l.b16 %v274
        %v306 = vunpack.c.l.b16 %v275
        %v307 = vunpack.c.l.b16 %v276
        %v308 = vunpack.c.l.b16 %v277
        %v309 = vunpack.c.l.b16 %v278
        %v310 = vunpack.c.l.b16 %v279
        %v311 = vpack.c.b16 %v300, %v299
        %v312 = vpack.c.b16 %v302, %v301
        %v313 = vpack.c.b16 %v304, %v303
        %v314 = vpack.c.b16 %v306, %v305
        %v315 = vpack.c.b16 %v308, %v307
        %v316 = vpack.c.b16 %v310, %v309
        %vm323 = vcmask 785408
        %v325 = vsel %vm323, %v261, 0
        %v328 = vsel %vm323, %v262, 0
        %v331 = vsel %vm323, %v263, 0
        %v334 = vsel %vm323, %v264, 0
        %v337 = vsel %vm323, %v265, 0
        %v340 = vsel %vm323, %v266, 0
        %v343 = vsel %vm323, %v267, 0
        %345 = vmatprep.subr.bf16.mxu0 0
        %346 = vmatpush1.bf16.msra.mxu0 0
        %347 = vmatprep.subr.bf16.mxu0 0
        %348 = vmatpush1.bf16.msra.mxu0 0
        %349 = vmatprep.subr.bf16.mxu0 0
        %350 = vmatpush1.bf16.msra.mxu0 %v316
        %351 = vmatprep.subr.bf16.mxu0 0
        %352 = vmatpush1.bf16.msra.mxu0 %v315
        %353 = vmatprep.subr.bf16.mxu0 0
        %354 = vmatpush1.bf16.msra.mxu0 %v314
        %355 = vmatprep.subr.bf16.mxu0 0
        %356 = vmatpush1.bf16.msra.mxu0 %v313
        %357 = vmatprep.subr.bf16.mxu0 0
        %358 = vmatpush1.bf16.msra.mxu0 %v312
        %359 = vmatprep.subr.bf16.mxu0 0
        %360 = vmatpush1.bf16.msra.mxu0 %v311
        %361 = vmatprep.subr.bf16.mxu0 0
        %362 = vmatpush2.bf16.msra.mxu0 0
        %363 = vmatprep.subr.bf16.mxu0 0
        %364 = vmatpush2.bf16.msra.mxu0 0
        %365 = vmatprep.subr.bf16.mxu0 0
        %366 = vmatpush2.bf16.msra.mxu0 0
        %367 = vmatprep.subr.bf16.mxu0 0
        %368 = vmatpush2.bf16.msra.mxu0 0
        %369 = vmatprep.subr.bf16.mxu0 0
        %370 = vmatpush2.bf16.msra.mxu0 0
        %371 = vmatprep.subr.bf16.mxu0 0
        %372 = vmatpush2.bf16.msra.mxu0 0
        %373 = vmatprep.subr.bf16.mxu0 0
        %374 = vmatpush2.bf16.msra.mxu0 0
        %375 = vmatprep.subr.bf16.mxu0 0
        %376 = vmatpush2.bf16.msra.mxu0 0
        %377 = vmatprep.mubr.bf16.mxu0 0
        %378 = vmatmul.mubr.bf16.gmra.mxu0 %v325
        %v379 = vpop.f32.mrf.mxu0
        %v380 = vadd.f32 %v285, %v379
        %v381 = vpop.f32.mrf.mxu0
        %v382 = vpop.f32.mrf.mxu0
        %v383 = vadd.f32 %v285, %v382
        %v384 = vpop.f32.mrf.mxu0
        %385 = vmatprep.mubr.bf16.mxu0 0
        %386 = vmatmul.mubr.bf16.gmra.mxu0 %v328
        %v387 = vpop.f32.mrf.mxu0
        %v388 = vadd.f32 %v285, %v387
        %v389 = vpop.f32.mrf.mxu0
        %v390 = vpop.f32.mrf.mxu0
        %v391 = vadd.f32 %v285, %v390
        %v392 = vpop.f32.mrf.mxu0
        %393 = vmatprep.mubr.bf16.mxu0 0
        %394 = vmatmul.mubr.bf16.gmra.mxu0 %v331
        %v395 = vpop.f32.mrf.mxu0
        %v396 = vadd.f32 %v285, %v395
        %v397 = vpop.f32.mrf.mxu0
        %v398 = vpop.f32.mrf.mxu0
        %v399 = vadd.f32 %v285, %v398
        %v400 = vpop.f32.mrf.mxu0
        %401 = vmatprep.mubr.bf16.mxu0 0
        %402 = vmatmul.mubr.bf16.gmra.mxu0 %v334
        %v403 = vpop.f32.mrf.mxu0
        %v404 = vadd.f32 %v285, %v403
        %v405 = vpop.f32.mrf.mxu0
        %v406 = vpop.f32.mrf.mxu0
        %v407 = vadd.f32 %v285, %v406
        %v408 = vpop.f32.mrf.mxu0
        %409 = vmatprep.mubr.bf16.mxu0 0
        %410 = vmatmul.mubr.bf16.gmra.mxu0 %v337
        %v411 = vpop.f32.mrf.mxu0
        %v412 = vadd.f32 %v285, %v411
        %v413 = vpop.f32.mrf.mxu0
        %v414 = vpop.f32.mrf.mxu0
        %v415 = vadd.f32 %v285, %v414
        %v416 = vpop.f32.mrf.mxu0
        %417 = vmatprep.mubr.bf16.mxu0 0
        %418 = vmatmul.mubr.bf16.gmra.mxu0 %v340
        %v419 = vpop.f32.mrf.mxu0
        %v420 = vadd.f32 %v285, %v419
        %v421 = vpop.f32.mrf.mxu0
        %v422 = vpop.f32.mrf.mxu0
        %v423 = vadd.f32 %v285, %v422
        %v424 = vpop.f32.mrf.mxu0
        %425 = vmatprep.mubr.bf16.mxu0 0
        %426 = vmatmul.mubr.bf16.gmra.mxu0 %v343
        %v427 = vpop.f32.mrf.mxu0
        %v428 = vadd.f32 %v285, %v427
        %v429 = vpop.f32.mrf.mxu0
        %v430 = vpop.f32.mrf.mxu0
        %v431 = vpop.f32.mrf.mxu0
        %432 = vdwg.mxu0
        %v433 = vmax.f32 %v380, 0.0
        %v434 = vmax.f32 %v383, 0.0
        %v435 = vmax.f32 %v388, 0.0
        %v436 = vmax.f32 %v391, 0.0
        %v437 = vmax.f32 %v396, 0.0
        %v438 = vmax.f32 %v399, 0.0
        %v439 = vmax.f32 %v404, 0.0
        %v440 = vmax.f32 %v407, 0.0
        %v441 = vmax.f32 %v412, 0.0
        %v442 = vmax.f32 %v415, 0.0
        %v443 = vmax.f32 %v420, 0.0
        %v444 = vmax.f32 %v423, 0.0
        %v445 = vmax.f32 %v428, 0.0
        %v446 = vld [vmem:[%s3] sm:$0x1]
        %v448 = vlaneseq
        %v449 = vshrl.u32 %v448, 7
        %v450 = vsub.s32 0, %v449
        %v451 = vrot.slane %v446, %v450
        %v453 = vmul.f32 %v433, %v451
        %v454 = vmul.f32 %v434, %v451
        %v455 = vmul.f32 %v435, %v451
        %v456 = vmul.f32 %v436, %v451
        %v457 = vmul.f32 %v437, %v451
        %v458 = vmul.f32 %v438, %v451
        %v459 = vmul.f32 %v439, %v451
        %v460 = vmul.f32 %v440, %v451
        %v461 = vmul.f32 %v441, %v451
        %v462 = vmul.f32 %v442, %v451
        %v463 = vmul.f32 %v443, %v451
        %v464 = vmul.f32 %v444, %v451
        %v465 = vmul.f32 %v445, %v451
        %vm466 = vcmask 326656
        %v467 = vsel %vm466, %v453, 0.0
        %468 = vadd.xlane.f32.xlu0 %v467
        %v469 = vpop.xlane.xlu0 %468
        %v470 = vsel %vm466, %v454, 0.0
        %471 = vadd.xlane.f32.xlu0 %v470
        %v472 = vpop.xlane.xlu0 %471
        %v473 = vsel %vm466, %v455, 0.0
        %474 = vadd.xlane.f32.xlu0 %v473
        %v475 = vpop.xlane.xlu0 %474
        %v476 = vsel %vm466, %v456, 0.0
        %477 = vadd.xlane.f32.xlu0 %v476
        %v478 = vpop.xlane.xlu0 %477
        %v479 = vsel %vm466, %v457, 0.0
        %480 = vadd.xlane.f32.xlu0 %v479
        %v481 = vpop.xlane.xlu0 %480
        %v482 = vsel %vm466, %v458, 0.0
        %483 = vadd.xlane.f32.xlu0 %v482
        %v484 = vpop.xlane.xlu0 %483
        %v485 = vsel %vm466, %v459, 0.0
        %486 = vadd.xlane.f32.xlu0 %v485
        %v487 = vpop.xlane.xlu0 %486
        %v488 = vsel %vm466, %v460, 0.0
        %489 = vadd.xlane.f32.xlu0 %v488
        %v490 = vpop.xlane.xlu0 %489
        %v491 = vsel %vm466, %v461, 0.0
        %492 = vadd.xlane.f32.xlu0 %v491
        %v493 = vpop.xlane.xlu0 %492
        %v494 = vsel %vm466, %v462, 0.0
        %495 = vadd.xlane.f32.xlu0 %v494
        %v496 = vpop.xlane.xlu0 %495
        %v497 = vsel %vm466, %v463, 0.0
        %498 = vadd.xlane.f32.xlu0 %v497
        %v499 = vpop.xlane.xlu0 %498
        %v500 = vsel %vm466, %v464, 0.0
        %501 = vadd.xlane.f32.xlu0 %v500
        %v502 = vpop.xlane.xlu0 %501
        %v503 = vsel %vm466, %v465, 0.0
        %504 = vadd.xlane.f32.xlu0 %v503
        %v505 = vpop.xlane.xlu0 %504
        %s506 = sld [smem:[#allocation2]]
        %v507 = vstv %s506
        %v508 = vadd.f32 %v469, %v507
        %v509 = vadd.f32 %v472, %v507
        %v510 = vadd.f32 %v475, %v507
        %v511 = vadd.f32 %v478, %v507
        %v512 = vadd.f32 %v481, %v507
        %v513 = vadd.f32 %v484, %v507
        %v514 = vadd.f32 %v487, %v507
        %v515 = vadd.f32 %v490, %v507
        %v516 = vadd.f32 %v493, %v507
        %v517 = vadd.f32 %v496, %v507
        %v518 = vadd.f32 %v499, %v507
        %v519 = vadd.f32 %v502, %v507
        %v520 = vadd.f32 %v505, %v507
        %v521 = vxor.u32 %v508, 2147483648
        %v522 = vxor.u32 %v509, 2147483648
        %v523 = vxor.u32 %v510, 2147483648
        %v524 = vxor.u32 %v511, 2147483648
        %v525 = vxor.u32 %v512, 2147483648
        %v526 = vxor.u32 %v513, 2147483648
        %v527 = vxor.u32 %v514, 2147483648
        %v528 = vxor.u32 %v515, 2147483648
        %v529 = vxor.u32 %v516, 2147483648
        %v530 = vxor.u32 %v517, 2147483648
        %v531 = vxor.u32 %v518, 2147483648
        %v532 = vxor.u32 %v519, 2147483648
        %v533 = vxor.u32 %v520, 2147483648
        %v534 = vmul.f32 %v521, 1.442695
        %v535 = vpow.pop %v534
        %v536 = vmul.f32 %v522, 1.442695
        %v537 = vpow.pop %v536
        %v538 = vmul.f32 %v523, 1.442695
        %v539 = vpow.pop %v538
        %v540 = vmul.f32 %v524, 1.442695
        %v541 = vpow.pop %v540
        %v542 = vmul.f32 %v525, 1.442695
        %v543 = vpow.pop %v542
        %v544 = vmul.f32 %v526, 1.442695
        %v545 = vpow.pop %v544
        %v546 = vmul.f32 %v527, 1.442695
        %v547 = vpow.pop %v546
        %v548 = vmul.f32 %v528, 1.442695
        %v549 = vpow.pop %v548
        %v550 = vmul.f32 %v529, 1.442695
        %v551 = vpow.pop %v550
        %v552 = vmul.f32 %v530, 1.442695
        %v553 = vpow.pop %v552
        %v554 = vmul.f32 %v531, 1.442695
        %v555 = vpow.pop %v554
        %v556 = vmul.f32 %v532, 1.442695
        %v557 = vpow.pop %v556
        %v558 = vmul.f32 %v533, 1.442695
        %v559 = vpow.pop %v558
        %v560 = vadd.f32 %v535, 1.0
        %v561 = vadd.f32 %v537, 1.0
        %v562 = vadd.f32 %v539, 1.0
        %v563 = vadd.f32 %v541, 1.0
        %v564 = vadd.f32 %v543, 1.0
        %v565 = vadd.f32 %v545, 1.0
        %v566 = vadd.f32 %v547, 1.0
        %v567 = vadd.f32 %v549, 1.0
        %v568 = vadd.f32 %v551, 1.0
        %v569 = vadd.f32 %v553, 1.0
        %v570 = vadd.f32 %v555, 1.0
        %v571 = vadd.f32 %v557, 1.0
        %v572 = vadd.f32 %v559, 1.0
        %v573 = vrcp.pop %v560
        %v574 = vmul.f32 1.0, %v573
        %v575 = vrcp.pop %v561
        %v576 = vmul.f32 1.0, %v575
        %v577 = vrcp.pop %v562
        %v578 = vmul.f32 1.0, %v577
        %v579 = vrcp.pop %v563
        %v580 = vmul.f32 1.0, %v579
        %v581 = vrcp.pop %v564
        %v582 = vmul.f32 1.0, %v581
        %v583 = vrcp.pop %v565
        %v584 = vmul.f32 1.0, %v583
        %v585 = vrcp.pop %v566
        %v586 = vmul.f32 1.0, %v585
        %v587 = vrcp.pop %v567
        %v588 = vmul.f32 1.0, %v587
        %v589 = vrcp.pop %v568
        %v590 = vmul.f32 1.0, %v589
        %v591 = vrcp.pop %v569
        %v592 = vmul.f32 1.0, %v591
        %v593 = vrcp.pop %v570
        %v594 = vmul.f32 1.0, %v593
        %v595 = vrcp.pop %v571
        %v596 = vmul.f32 1.0, %v595
        %v597 = vrcp.pop %v572
        %v598 = vmul.f32 1.0, %v597
        %vm599 = vcmask 7168
        %600 = vst.msk [vmem:[%s227] sm:$0xff] %vm599, %v574
        %601 = vst.msk [vmem:[%s227 + $0x8] sm:$0xff] %vm599, %v576
        %602 = vst.msk [vmem:[%s227 + $0x10] sm:$0xff] %vm599, %v578
        %603 = vst.msk [vmem:[%s227 + $0x18] sm:$0xff] %vm599, %v580
        %604 = vst.msk [vmem:[%s227 + $0x20] sm:$0xff] %vm599, %v582
        %605 = vst.msk [vmem:[%s227 + $0x28] sm:$0xff] %vm599, %v584
        %606 = vst.msk [vmem:[%s227 + $0x30] sm:$0xff] %vm599, %v586
        %607 = vst.msk [vmem:[%s227 + $0x38] sm:$0xff] %vm599, %v588
        %608 = vst.msk [vmem:[%s227 + $0x40] sm:$0xff] %vm599, %v590
        %609 = vst.msk [vmem:[%s227 + $0x48] sm:$0xff] %vm599, %v592
        %610 = vst.msk [vmem:[%s227 + $0x50] sm:$0xff] %vm599, %v594
        %611 = vst.msk [vmem:[%s227 + $0x58] sm:$0xff] %vm599, %v596
        %612 = vst.msk [vmem:[%s227 + $0x60] sm:$0xff] %vm599, %v598
        %s613 = sand.u32 %s135, 1
        %s614 = sand.u32 %s135, 1
        %s615 = smul.addr %s614, 104
        %s616 = scalar_lea.vmem [#allocation3], %s615
        // Predicated region
        $region41: #{tpu_custom_call.1} parent=39 // pred_check
          %p617 = pneg %p145
        $region42: #{tpu_custom_call.1} parent=39 // pred_check_branch
          %619 = sbr.rel (%p617) target = $region44
        $region43: #{tpu_custom_call.1} parent=39 // pred_region
          %s620 = smul.u32 13, %s17
          %s621 = ssub.s32 25, %s620
          %p622 = scmp.lt.s32.totalorder %s621, 13
          %s623 = scalar_select %p622, %s621, 13
          %s624 = smul.u32 128, %s623
          %p625 = scmp.ne.s32.totalorder 0, %s624
          %s626 = smul.addr %s620, 8
          %s627 = scalar_lea.vmem %s5, %s626
          // Predicated region
          $region45: #{tpu_custom_call.1} parent=43 // pred_check
            %p628 = pneg %p625
          $region46: #{tpu_custom_call.1} parent=43 // pred_check_branch
            %630 = sbr.rel (%p628) target = $region48
          $region47: #{tpu_custom_call.1} parent=43 // pred_region
            // Predicated region
            $region49: #{tpu_custom_call.1} parent=47 // pred_check
              _
            $region50: #{tpu_custom_call.1} parent=47 // pred_check_branch
              %632 = sbr.rel (0) target = $region52
            $region51: #{tpu_custom_call.1} parent=47 // pred_region
              // Predicated region
              $region71: #{tpu_custom_call.1} parent=51 // pred_check
                _
              $region72: #{tpu_custom_call.1} parent=51 // pred_check_branch
                %707 = sbr.rel (0) target = $region74
              $region73: #{tpu_custom_call.1} parent=51 // pred_region
                %s708 = sdiv.u32.pop %s623, 13
                %s709 = srem.u32.pop %s623, 13
                // While loop
                $region75: #{tpu_custom_call.1} parent=73 // loop_pre_header
                  _
                $region76: #{tpu_custom_call.1} parent=73 // loop_header
                  %s711 = sphi 0, %s713
                  %p712 = scmp.ge.s32.totalorder %s711, %s708
                  %s716 = sphi 0, %s747
                  %s717 = sphi %s616, %s750
                  %s718 = sphi %s627, %s751
                $region77: #{tpu_custom_call.1} parent=73 // loop_header_branch
                  %715 = sbr.rel (%p712) target = $region81
                $region78: #{tpu_custom_call.1} parent=73 // loop_body
                  %v719 = vld [vmem:[%s717] sm:$0xff]
                  %720 = vst [vmem:[%s718] sm:$0xff] %v719
                  %v721 = vld [vmem:[%s717 + $0x8] sm:$0xff]
                  %722 = vst [vmem:[%s718 + $0x8] sm:$0xff] %v721
                  %v723 = vld [vmem:[%s717 + $0x10] sm:$0xff]
                  %724 = vst [vmem:[%s718 + $0x10] sm:$0xff] %v723
                  %v725 = vld [vmem:[%s717 + $0x18] sm:$0xff]
                  %726 = vst [vmem:[%s718 + $0x18] sm:$0xff] %v725
                  %v727 = vld [vmem:[%s717 + $0x20] sm:$0xff]
                  %728 = vst [vmem:[%s718 + $0x20] sm:$0xff] %v727
                  %v729 = vld [vmem:[%s717 + $0x28] sm:$0xff]
                  %730 = vst [vmem:[%s718 + $0x28] sm:$0xff] %v729
                  %v731 = vld [vmem:[%s717 + $0x30] sm:$0xff]
                  %732 = vst [vmem:[%s718 + $0x30] sm:$0xff] %v731
                  %v733 = vld [vmem:[%s717 + $0x38] sm:$0xff]
                  %734 = vst [vmem:[%s718 + $0x38] sm:$0xff] %v733
                  %v735 = vld [vmem:[%s717 + $0x40] sm:$0xff]
                  %736 = vst [vmem:[%s718 + $0x40] sm:$0xff] %v735
                  %v737 = vld [vmem:[%s717 + $0x48] sm:$0xff]
                  %738 = vst [vmem:[%s718 + $0x48] sm:$0xff] %v737
                  %v739 = vld [vmem:[%s717 + $0x50] sm:$0xff]
                  %740 = vst [vmem:[%s718 + $0x50] sm:$0xff] %v739
                  %v741 = vld [vmem:[%s717 + $0x58] sm:$0xff]
                  %742 = vst [vmem:[%s718 + $0x58] sm:$0xff] %v741
                  %v743 = vld [vmem:[%s717 + $0x60] sm:$0xff]
                  %744 = vst [vmem:[%s718 + $0x60] sm:$0xff] %v743
                  %s745 = sadd.s32 1, %s716
                  %p746 = scmp.ge.s32.totalorder %s745, %s708
                  %s747 = scalar_select %p746, 0, %s745
                  %s748 = smul.u32 %s747, 104
                  %s749 = smul.u32 %s747, 104
                  %s750 = scalar_lea.vmem %s616, %s748 [#allocation3]
                  %s751 = scalar_lea.vmem %s627, %s749
                $region79: #{tpu_custom_call.1} parent=73 // loop_footer
                  %s713 = sadd.s32 %s711, 1
                $region80: #{tpu_custom_call.1} parent=73 // loop_footer_branch
                  %710 = sbr.rel target = $region76
                $region81: #{tpu_custom_call.1} parent=73 // loop_exit
                  _
                %s752 = sdiv.u32.pop %s623, 13
                %s753 = srem.u32.pop %s623, 13
                %s754 = smul.u32 %s752, 13
                %s755 = smul.u32 8, %s754
                %s756 = scalar_lea.vmem %s616, %s755 [#allocation3]
                %s757 = smul.u32 8, %s754
                %s758 = scalar_lea.vmem %s627, %s757
                // While loop
                $region82: #{tpu_custom_call.1} parent=73 // loop_pre_header
                  _
                $region83: #{tpu_custom_call.1} parent=73 // loop_header
                  %s760 = sphi 0, %s762
                  %p761 = scmp.ge.s32.totalorder %s760, %s753
                  %s765 = sphi 0, %s772
                  %s766 = sphi %s756, %s775
                  %s767 = sphi %s758, %s776
                $region84: #{tpu_custom_call.1} parent=73 // loop_header_branch
                  %764 = sbr.rel (%p761) target = $region88
                $region85: #{tpu_custom_call.1} parent=73 // loop_body
                  %v768 = vld [vmem:[%s766] sm:$0xff]
                  %769 = vst [vmem:[%s767] sm:$0xff] %v768
                  %s770 = sadd.s32 1, %s765
                  %p771 = scmp.ge.s32.totalorder %s770, %s753
                  %s772 = scalar_select %p771, 0, %s770
                  %s773 = smul.u32 %s772, 8
                  %s774 = smul.u32 %s772, 8
                  %s775 = scalar_lea.vmem %s756, %s773 [#allocation3]
                  %s776 = scalar_lea.vmem %s758, %s774
                $region86: #{tpu_custom_call.1} parent=73 // loop_footer
                  %s762 = sadd.s32 %s760, 1
                $region87: #{tpu_custom_call.1} parent=73 // loop_footer_branch
                  %759 = sbr.rel target = $region83
                $region88: #{tpu_custom_call.1} parent=73 // loop_exit
                  _
              $region74: #{tpu_custom_call.1} parent=51 // pred_fallthru
                _
              // Predicated region
              $region89: #{tpu_custom_call.1} parent=51 // pred_check
                _
              $region90: #{tpu_custom_call.1} parent=51 // pred_check_branch
                %778 = sbr.rel target = $region92
              $region91: #{tpu_custom_call.1} parent=51 // pred_region
                _
              $region92: #{tpu_custom_call.1} parent=51 // pred_fallthru
                _
            $region52: #{tpu_custom_call.1} parent=47 // pred_fallthru
              _
            // Predicated region
            $region53: #{tpu_custom_call.1} parent=47 // pred_check
              _
            $region54: #{tpu_custom_call.1} parent=47 // pred_check_branch
              %634 = sbr.rel target = $region56
            $region55: #{tpu_custom_call.1} parent=47 // pred_region
              %s636 = ssub.s32 256, 1
              %s637 = sdiv.u32.pop %s623, 13
              %s638 = srem.u32.pop %s623, 13
              // While loop
              $region57: #{tpu_custom_call.1} parent=55 // loop_pre_header
                _
              $region58: #{tpu_custom_call.1} parent=55 // loop_header
                %s640 = sphi 0, %s642
                %p641 = scmp.ge.s32.totalorder %s640, %s637
                %s645 = sphi 0, %s676
                %s646 = sphi %s616, %s679
                %s647 = sphi %s627, %s680
              $region59: #{tpu_custom_call.1} parent=55 // loop_header_branch
                %644 = sbr.rel (%p641) target = $region63
              $region60: #{tpu_custom_call.1} parent=55 // loop_body
                %v648 = vld [vmem:[%s646] sm:%s636]
                %649 = vst [vmem:[%s647] sm:%s636] %v648
                %v650 = vld [vmem:[%s646 + $0x8] sm:%s636]
                %651 = vst [vmem:[%s647 + $0x8] sm:%s636] %v650
                %v652 = vld [vmem:[%s646 + $0x10] sm:%s636]
                %653 = vst [vmem:[%s647 + $0x10] sm:%s636] %v652
                %v654 = vld [vmem:[%s646 + $0x18] sm:%s636]
                %655 = vst [vmem:[%s647 + $0x18] sm:%s636] %v654
                %v656 = vld [vmem:[%s646 + $0x20] sm:%s636]
                %657 = vst [vmem:[%s647 + $0x20] sm:%s636] %v656
                %v658 = vld [vmem:[%s646 + $0x28] sm:%s636]
                %659 = vst [vmem:[%s647 + $0x28] sm:%s636] %v658
                %v660 = vld [vmem:[%s646 + $0x30] sm:%s636]
                %661 = vst [vmem:[%s647 + $0x30] sm:%s636] %v660
                %v662 = vld [vmem:[%s646 + $0x38] sm:%s636]
                %663 = vst [vmem:[%s647 + $0x38] sm:%s636] %v662
                %v664 = vld [vmem:[%s646 + $0x40] sm:%s636]
                %665 = vst [vmem:[%s647 + $0x40] sm:%s636] %v664
                %v666 = vld [vmem:[%s646 + $0x48] sm:%s636]
                %667 = vst [vmem:[%s647 + $0x48] sm:%s636] %v666
                %v668 = vld [vmem:[%s646 + $0x50] sm:%s636]
                %669 = vst [vmem:[%s647 + $0x50] sm:%s636] %v668
                %v670 = vld [vmem:[%s646 + $0x58] sm:%s636]
                %671 = vst [vmem:[%s647 + $0x58] sm:%s636] %v670
                %v672 = vld [vmem:[%s646 + $0x60] sm:%s636]
                %673 = vst [vmem:[%s647 + $0x60] sm:%s636] %v672
                %s674 = sadd.s32 1, %s645
                %p675 = scmp.ge.s32.totalorder %s674, %s637
                %s676 = scalar_select %p675, 0, %s674
                %s677 = smul.u32 %s676, 104
                %s678 = smul.u32 %s676, 104
                %s679 = scalar_lea.vmem %s616, %s677 [#allocation3]
                %s680 = scalar_lea.vmem %s627, %s678
              $region61: #{tpu_custom_call.1} parent=55 // loop_footer
                %s642 = sadd.s32 %s640, 1
              $region62: #{tpu_custom_call.1} parent=55 // loop_footer_branch
                %639 = sbr.rel target = $region58
              $region63: #{tpu_custom_call.1} parent=55 // loop_exit
                _
              %s681 = sdiv.u32.pop %s623, 13
              %s682 = srem.u32.pop %s623, 13
              %s683 = smul.u32 %s681, 13
              %s684 = smul.u32 8, %s683
              %s685 = scalar_lea.vmem %s616, %s684 [#allocation3]
              %s686 = smul.u32 8, %s683
              %s687 = scalar_lea.vmem %s627, %s686
              // While loop
              $region64: #{tpu_custom_call.1} parent=55 // loop_pre_header
                _
              $region65: #{tpu_custom_call.1} parent=55 // loop_header
                %s689 = sphi 0, %s691
                %p690 = scmp.ge.s32.totalorder %s689, %s682
                %s694 = sphi 0, %s701
                %s695 = sphi %s685, %s704
                %s696 = sphi %s687, %s705
              $region66: #{tpu_custom_call.1} parent=55 // loop_header_branch
                %693 = sbr.rel (%p690) target = $region70
              $region67: #{tpu_custom_call.1} parent=55 // loop_body
                %v697 = vld [vmem:[%s695] sm:%s636]
                %698 = vst [vmem:[%s696] sm:%s636] %v697
                %s699 = sadd.s32 1, %s694
                %p700 = scmp.ge.s32.totalorder %s699, %s682
                %s701 = scalar_select %p700, 0, %s699
                %s702 = smul.u32 %s701, 8
                %s703 = smul.u32 %s701, 8
                %s704 = scalar_lea.vmem %s685, %s702 [#allocation3]
                %s705 = scalar_lea.vmem %s687, %s703
              $region68: #{tpu_custom_call.1} parent=55 // loop_footer
                %s691 = sadd.s32 %s689, 1
              $region69: #{tpu_custom_call.1} parent=55 // loop_footer_branch
                %688 = sbr.rel target = $region65
              $region70: #{tpu_custom_call.1} parent=55 // loop_exit
                _
            $region56: #{tpu_custom_call.1} parent=47 // pred_fallthru
              _
          $region48: #{tpu_custom_call.1} parent=43 // pred_fallthru
            _
          %779 = vnop
        $region44: #{tpu_custom_call.1} parent=39 // pred_fallthru
          _
      $region40: #{tpu_custom_call.1} parent=5 // pred_fallthru
        _
      %p780 = scmp.le.s32.totalorder 2, %s12
      // Predicated region
      $region93: #{tpu_custom_call.1} parent=5 // pred_check
        %p781 = pneg %p780
      $region94: #{tpu_custom_call.1} parent=5 // pred_check_branch
        %783 = sbr.rel (%p781) target = $region96
      $region95: #{tpu_custom_call.1} parent=5 // pred_region
        %s784 = ssub.s32 %s12, 2
        // Predicated region
        $region97: #{tpu_custom_call.1} parent=95 // pred_check
          %p785 = pneg %p151
        $region98: #{tpu_custom_call.1} parent=95 // pred_check_branch
          %787 = sbr.rel (%p785) target = $region100
        $region99: #{tpu_custom_call.1} parent=95 // pred_region
          %s788 = sand.u32 %s136, 1
          %s789 = sand.u32 %s136, 1
          %s790 = smul.addr %s789, 104
          %s791 = scalar_lea.vmem [#allocation3], %s790
        $region100: #{tpu_custom_call.1} parent=95 // pred_fallthru
          _
      $region96: #{tpu_custom_call.1} parent=5 // pred_fallthru
        _
    $region6: #{tpu_custom_call.1} parent=1 // loop_footer
      %s16 = sadd.s32 1, %s12
    $region7: #{tpu_custom_call.1} parent=1 // loop_footer_branch
      %11 = sbr.rel target = $region3
    $region8: #{tpu_custom_call.1} parent=1 // loop_exit
      _

</llo_original>
